<compile_context>
chip_gen: v7x
topology: tpu7x:2x2x1
jax: 0.10.0
libtpu: 0.0.40
codegen_flags: <defaults>
</compile_context>

<pallas_src>
import jax
import jax.numpy as jnp
from jax.experimental import pallas as pl
from jax.experimental.pallas import tpu as pltpu


def _round_up(v, m):
    return ((v + m - 1) // m) * m


def gcn_kernel(x_ref, adj_ref, w1_ref, b1_ref, w2t_ref, b2_ref,
               out_ref, support_ref):
    # support = x @ W1, computed once into a persistent VMEM scratch and
    # reused for every adjacency row tile.
    @pl.when(pl.program_id(0) == 0)
    def _():
        support_ref[...] = jnp.dot(
            x_ref[...], w1_ref[...], preferred_element_type=jnp.float32
        ).astype(support_ref.dtype)

    # gc1: adj_tile @ support + b1, then ReLU  ->  [TILE_N, H_pad] (f32 acc)
    gc = jnp.dot(adj_ref[...], support_ref[...],
                 preferred_element_type=jnp.float32)
    h = jnp.maximum(gc + b1_ref[...], 0.0)

    # dense: h @ W2^T + b2 with W2 pre-transposed in the wrapper
    # (lane-contiguous MXU operand, no in-kernel transpose).
    y = jnp.dot(h.astype(w2t_ref.dtype), w2t_ref[...],
                preferred_element_type=jnp.float32)
    out_ref[...] = (y + b2_ref[...]).astype(out_ref.dtype)


def gcn_forward(x, adj, w1, b1, w2, b2, *,
                compute_dtype=jnp.float32, tile_n=256):
    """GCN forward.  x:[N,F], adj:[N,N], w1:[F,H], b1:[H] or [1,H],
    w2:[C,H] (PyTorch Linear layout), b2:[C] or [1,C].  Returns [N,C] f32."""
    N, nfeat = x.shape
    nclass, nhid = w2.shape
    cdt = jnp.dtype(compute_dtype)

    # Lane-dense padded dims (multiples of 128) and row tiling (multiple of 8).
    F_pad = _round_up(nfeat, 128)
    H_pad = _round_up(nhid, 128)
    C_pad = _round_up(nclass, 128)
    TILE_N = min(tile_n, _round_up(N, 8))
    N_pad = _round_up(N, TILE_N)

    # Zero-padding preserves numerics exactly: padded features/hidden/class
    # columns contribute zero, padded rows are sliced away at the end.
    x_p = jnp.zeros((N_pad, F_pad), cdt).at[:N, :nfeat].set(x.astype(cdt))
    adj_p = jnp.zeros((N_pad, N_pad), cdt).at[:N, :N].set(adj.astype(cdt))
    w1_p = jnp.zeros((F_pad, H_pad), cdt).at[:nfeat, :nhid].set(w1.astype(cdt))
    b1_p = jnp.zeros((1, H_pad), jnp.float32).at[:, :nhid].set(
        b1.reshape(1, nhid).astype(jnp.float32))
    w2t_p = jnp.zeros((H_pad, C_pad), cdt).at[:nhid, :nclass].set(
        w2.T.astype(cdt))
    b2_p = jnp.zeros((1, C_pad), jnp.float32).at[:, :nclass].set(
        b2.reshape(1, nclass).astype(jnp.float32))

    grid = (N_pad // TILE_N,)

    # Cost estimate (advisory, for XLA scheduling around the custom call).
    flops = (2 * N_pad * F_pad * H_pad        # x @ W1
             + 2 * N_pad * N_pad * H_pad      # adj @ support
             + 2 * N_pad * H_pad * C_pad)     # h @ W2^T
    bytes_accessed = (x_p.nbytes + adj_p.nbytes + w1_p.nbytes + b1_p.nbytes
                      + w2t_p.nbytes + b2_p.nbytes + N_pad * C_pad * 4)

    # VMEM budget: resident operands + double-buffered adj/out tiles + scratch.
    itemsize = cdt.itemsize
    resident = (x_p.nbytes + w1_p.nbytes + w2t_p.nbytes
                + b1_p.nbytes + b2_p.nbytes)
    pipelined = 2 * TILE_N * N_pad * itemsize + 2 * TILE_N * C_pad * 4
    scratch = N_pad * H_pad * itemsize
    vmem_limit = int(1.25 * (resident + pipelined + scratch)) + (2 << 20)
    vmem_limit = min(max(vmem_limit, 16 << 20), 64 << 20)  # v7x-safe cap

    out_padded = pl.pallas_call(
        gcn_kernel,
        out_shape=jax.ShapeDtypeStruct((N_pad, C_pad), jnp.float32),
        grid_spec=pltpu.PrefetchScalarGridSpec(
            num_scalar_prefetch=0,
            grid=grid,
            in_specs=[
                pl.BlockSpec((N_pad, F_pad), lambda i: (0, 0)),   # x (resident)
                pl.BlockSpec((TILE_N, N_pad), lambda i: (i, 0)),  # adj row tile
                pl.BlockSpec((F_pad, H_pad), lambda i: (0, 0)),   # W1 (resident)
                pl.BlockSpec((1, H_pad), lambda i: (0, 0)),       # b1
                pl.BlockSpec((H_pad, C_pad), lambda i: (0, 0)),   # W2^T (resident)
                pl.BlockSpec((1, C_pad), lambda i: (0, 0)),       # b2
            ],
            out_specs=pl.BlockSpec((TILE_N, C_pad), lambda i: (i, 0)),
            scratch_shapes=[pltpu.VMEM((N_pad, H_pad), cdt)],     # support
        ),
        compiler_params=pltpu.CompilerParams(
            dimension_semantics=("arbitrary",),   # see TODO(synk) above
            vmem_limit_bytes=vmem_limit,
        ),
        cost_estimate=pl.CostEstimate(
            flops=flops, transcendentals=0, bytes_accessed=bytes_accessed),
    )(x_p, adj_p, w1_p, b1_p, w2t_p, b2_p)

    return out_padded[:N, :nclass]


def gcn_reference(x, adj, w1, b1, w2, b2):
    h = jnp.maximum(adj @ (x @ w1) + b1.reshape(1, -1), 0.0)
    return h @ w2.T + b2.reshape(1, -1)


if __name__ == "__main__":
    # Small shapes consistent with the module's forward:
    #   N nodes, nFeat input features, nhid hidden units, nclass outputs.
    N, nFeat, nhid, nclass = 16, 32, 32, 8

    key = jax.random.PRNGKey(0)
    kx, kadj, kw1, kb1, kw2, kb2 = jax.random.split(key, 6)

    x = jax.random.normal(kx, (N, nFeat), dtype=jnp.float32)
    # Simple symmetric, row-normalized adjacency (deterministic).
    a = jax.random.uniform(kadj, (N, N), dtype=jnp.float32)
    adj = (a + a.T) * 0.5 + jnp.eye(N, dtype=jnp.float32)
    adj = adj / jnp.sum(adj, axis=1, keepdims=True)

    # Parameters (deterministic synthetic init, shapes from __init__).
    w1 = jax.random.uniform(kw1, (nFeat, nhid), dtype=jnp.float32,
                            minval=-0.1, maxval=0.1)       # gc1.weight
    b1 = jax.random.uniform(kb1, (1, nhid), dtype=jnp.float32,
                            minval=-0.1, maxval=0.1)       # gc1.bias
    w2 = jax.random.uniform(kw2, (nclass, nhid), dtype=jnp.float32,
                            minval=-0.1, maxval=0.1)       # dense.weight
    b2 = jax.random.uniform(kb2, (1, nclass), dtype=jnp.float32,
                            minval=-0.1, maxval=0.1)       # dense.bias

    out = gcn_forward(x, adj, w1, b1, w2, b2)               # f32 path
    out = jax.block_until_ready(out)

    ref = gcn_reference(x, adj, w1, b1, w2, b2)
    assert out.shape == (N, nclass)
    assert jnp.allclose(out, ref, atol=1e-4, rtol=1e-4), "mismatch vs reference"

    print("KERNEL_OK")
</pallas_src>

<mosaic_0001>
module attributes {stable_mosaic.version = 11 : i64} {
  func.func @gcn_kernel(%arg0: i32, %arg1: memref<16x128xf32, #tpu.memory_space<vmem>>, %arg2: memref<16x16xf32, #tpu.memory_space<vmem>>, %arg3: memref<128x128xf32, #tpu.memory_space<vmem>>, %arg4: memref<1x128xf32, #tpu.memory_space<vmem>>, %arg5: memref<128x128xf32, #tpu.memory_space<vmem>>, %arg6: memref<1x128xf32, #tpu.memory_space<vmem>>, %arg7: memref<16x128xf32, #tpu.memory_space<vmem>>, %arg8: memref<16x128xf32, #tpu.memory_space<vmem>>) attributes {dimension_semantics = [#tpu.dimension_semantics<arbitrary>], iteration_bounds = array<i64: 1>, scalar_prefetch = 0 : i64, scratch_operands = 1 : i64, tpu.core_type = #tpu.core_type<tc>, window_params = [{pipeline_mode = #tpu.pipeline_mode<synchronous>, transform_indices = @transform_0, window_bounds = array<i64: 16, 128>}, {transform_indices = @transform_1, window_bounds = array<i64: 16, 16>}, {pipeline_mode = #tpu.pipeline_mode<synchronous>, transform_indices = @transform_2, window_bounds = array<i64: 128, 128>}, {pipeline_mode = #tpu.pipeline_mode<synchronous>, transform_indices = @transform_3, window_bounds = array<i64: 1, 128>}, {pipeline_mode = #tpu.pipeline_mode<synchronous>, transform_indices = @transform_4, window_bounds = array<i64: 128, 128>}, {pipeline_mode = #tpu.pipeline_mode<synchronous>, transform_indices = @transform_5, window_bounds = array<i64: 1, 128>}, {transform_indices = @transform_6, window_bounds = array<i64: 16, 128>}]} {
    %c0_i32 = arith.constant 0 : i32
    %0 = arith.cmpi eq, %arg0, %c0_i32 : i32
    %1 = arith.extui %0 : i1 to i32
    %c0_i32_0 = arith.constant 0 : i32
    %2 = arith.cmpi ne, %1, %c0_i32_0 : i32
    scf.if %2 {
      %c0_14 = arith.constant 0 : index
      %c0_15 = arith.constant 0 : index
      %17 = vector.load %arg1[%c0_14, %c0_15] : memref<16x128xf32, #tpu.memory_space<vmem>>, vector<16x128xf32>
      %c0_16 = arith.constant 0 : index
      %c0_17 = arith.constant 0 : index
      %18 = vector.load %arg3[%c0_16, %c0_17] : memref<128x128xf32, #tpu.memory_space<vmem>>, vector<128x128xf32>
      %cst_18 = arith.constant dense<0.000000e+00> : vector<16x128xf32>
      %19 = tpu.matmul %17, %18, %cst_18 {dimension_numbers = #tpu.dot_dimension_numbers<[1], [0], [0], [1], [0, 0, 1, 1], [], []>} : vector<16x128xf32>, vector<128x128xf32>, vector<16x128xf32> -> vector<16x128xf32>
      %c0_19 = arith.constant 0 : index
      %c0_20 = arith.constant 0 : index
      %20 = vector.load %arg8[%c0_19, %c0_20] : memref<16x128xf32, #tpu.memory_space<vmem>>, vector<16x128xf32>
      tpu.vector_store %arg8[%c0_19, %c0_20], %19 {strides = array<i32>} : memref<16x128xf32, #tpu.memory_space<vmem>>, vector<16x128xf32>,
    } else {
    }
    %c0 = arith.constant 0 : index
    %c0_1 = arith.constant 0 : index
    %3 = vector.load %arg2[%c0, %c0_1] : memref<16x16xf32, #tpu.memory_space<vmem>>, vector<16x16xf32>
    %c0_2 = arith.constant 0 : index
    %c0_3 = arith.constant 0 : index
    %4 = vector.load %arg8[%c0_2, %c0_3] : memref<16x128xf32, #tpu.memory_space<vmem>>, vector<16x128xf32>
    %cst = arith.constant dense<0.000000e+00> : vector<16x128xf32>
    %5 = tpu.matmul %3, %4, %cst {dimension_numbers = #tpu.dot_dimension_numbers<[1], [0], [0], [1], [0, 0, 1, 1], [], []>} : vector<16x16xf32>, vector<16x128xf32>, vector<16x128xf32> -> vector<16x128xf32>
    %c0_4 = arith.constant 0 : index
    %c0_5 = arith.constant 0 : index
    %6 = vector.load %arg4[%c0_4, %c0_5] : memref<1x128xf32, #tpu.memory_space<vmem>>, vector<1x128xf32>
    %7 = vector.broadcast %6 : vector<1x128xf32> to vector<16x128xf32>
    %8 = arith.addf %5, %7 : vector<16x128xf32>
    %cst_6 = arith.constant 0.000000e+00 : f32
    %9 = vector.broadcast %cst_6 : f32 to vector<16x128xf32>
    %10 = arith.maximumf %8, %9 : vector<16x128xf32>
    %c0_7 = arith.constant 0 : index
    %c0_8 = arith.constant 0 : index
    %11 = vector.load %arg5[%c0_7, %c0_8] : memref<128x128xf32, #tpu.memory_space<vmem>>, vector<128x128xf32>
    %cst_9 = arith.constant dense<0.000000e+00> : vector<16x128xf32>
    %12 = tpu.matmul %10, %11, %cst_9 {dimension_numbers = #tpu.dot_dimension_numbers<[1], [0], [0], [1], [0, 0, 1, 1], [], []>} : vector<16x128xf32>, vector<128x128xf32>, vector<16x128xf32> -> vector<16x128xf32>
    %c0_10 = arith.constant 0 : index
    %c0_11 = arith.constant 0 : index
    %13 = vector.load %arg6[%c0_10, %c0_11] : memref<1x128xf32, #tpu.memory_space<vmem>>, vector<1x128xf32>
    %14 = vector.broadcast %13 : vector<1x128xf32> to vector<16x128xf32>
    %15 = arith.addf %12, %14 : vector<16x128xf32>
    %c0_12 = arith.constant 0 : index
    %c0_13 = arith.constant 0 : index
    %16 = vector.load %arg7[%c0_12, %c0_13] : memref<16x128xf32, #tpu.memory_space<vmem>>, vector<16x128xf32>
    tpu.vector_store %arg7[%c0_12, %c0_13], %15 {strides = array<i32>} : memref<16x128xf32, #tpu.memory_space<vmem>>, vector<16x128xf32>,
    return
  }
  func.func @transform_0(%arg0: i32) -> (i32, i32) {
    %c0_i32 = arith.constant 0 : i32
    %c0_i32_0 = arith.constant 0 : i32
    %c0_i32_1 = arith.constant 0 : i32
    return %c0_i32, %c0_i32_0 : i32, i32
  }
  func.func @transform_1(%arg0: i32) -> (i32, i32) {
    %c0_i32 = arith.constant 0 : i32
    %c0_i32_0 = arith.constant 0 : i32
    return %arg0, %c0_i32 : i32, i32
  }
  func.func @transform_2(%arg0: i32) -> (i32, i32) {
    %c0_i32 = arith.constant 0 : i32
    %c0_i32_0 = arith.constant 0 : i32
    %c0_i32_1 = arith.constant 0 : i32
    return %c0_i32, %c0_i32_0 : i32, i32
  }
  func.func @transform_3(%arg0: i32) -> (i32, i32) {
    %c0_i32 = arith.constant 0 : i32
    %c0_i32_0 = arith.constant 0 : i32
    %c0_i32_1 = arith.constant 0 : i32
    return %c0_i32, %c0_i32_0 : i32, i32
  }
  func.func @transform_4(%arg0: i32) -> (i32, i32) {
    %c0_i32 = arith.constant 0 : i32
    %c0_i32_0 = arith.constant 0 : i32
    %c0_i32_1 = arith.constant 0 : i32
    return %c0_i32, %c0_i32_0 : i32, i32
  }
  func.func @transform_5(%arg0: i32) -> (i32, i32) {
    %c0_i32 = arith.constant 0 : i32
    %c0_i32_0 = arith.constant 0 : i32
    %c0_i32_1 = arith.constant 0 : i32
    return %c0_i32, %c0_i32_0 : i32, i32
  }
  func.func @transform_6(%arg0: i32) -> (i32, i32) {
    %c0_i32 = arith.constant 0 : i32
    %c0_i32_0 = arith.constant 0 : i32
    return %arg0, %c0_i32 : i32, i32
  }
}

</mosaic_0001>

<llo_original>
// kernel: tpu_custom_call.1
$region0: #{tpu_custom_call.1}
  #allocation0 [shape = 'u32[]', space=smem, size = 0x4, offset = 0x4, fixed_abs, tag = 'smem constant byte address 0x4 - core index']
  #allocation1 [shape = 'u32[144,128]{1,0:T(1,128)}', space=vmem, size = 0x12000, scoped, tag = 'internal scratch']
  #allocation2 [shape = 'f32[16,128]{1,0:T(8,128)}', space=vmem, size = 0x2000, scoped, tag = 'scratch operand']
  %s0 = inlined_call_operand.hbm [shape: f32[16,128], index: 0, kind: input, shape index: {}]
  %s1 = inlined_call_operand.hbm [shape: f32[16,16], index: 1, kind: input, shape index: {}]
  %s2 = inlined_call_operand.hbm [shape: f32[128,128], index: 2, kind: input, shape index: {}]
  %s3 = inlined_call_operand.vmem [shape: f32[1,128], index: 3, kind: input, shape index: {}]
  %s4 = inlined_call_operand.hbm [shape: f32[128,128], index: 4, kind: input, shape index: {}]
  %s5 = inlined_call_operand.vmem [shape: f32[1,128], index: 5, kind: input, shape index: {}]
  %s6 = inlined_call_operand.hbm [shape: f32[16,128], index: 6, kind: output, shape index: {}]
  %s7 = sld [smem:[#allocation0]]
  $region54: #{tpu_custom_call.1} parent=0
    _
  %s9 = ssub.s32 1, %s7
  %s10 = scalar_select 0, %s9, %s7
  $region1: #{tpu_custom_call.1} parent=0
    #allocation3 [shape = 'u8[8192]{0}', space=vmem, size = 0x2000, scoped, tag = 'input window, operand 0, single buffered']
    #allocation4 [shape = 's32[1]{0}', space=sflag, size = 0x4, scoped, tag = 'scoped memory for tpu_custom_call.1']
    #allocation5 [shape = 's32[1]{0}', space=sflag, size = 0x4, scoped, tag = 'scoped memory for tpu_custom_call.1']
    #allocation6 [shape = 'u8[8192]{0}', space=vmem, size = 0x2000, scoped, tag = 'input window, operand 1, single buffered']
    #allocation7 [shape = 's32[1]{0}', space=sflag, size = 0x4, scoped, tag = 'scoped memory for tpu_custom_call.1']
    #allocation8 [shape = 'u8[65536]{0}', space=vmem, size = 0x10000, scoped, tag = 'input window, operand 2, single buffered']
    #allocation9 [shape = 'u8[65536]{0}', space=vmem, size = 0x10000, scoped, tag = 'input window, operand 4, single buffered']
    #allocation10 [shape = 's32[1]{0}', space=sflag, size = 0x4, scoped, tag = 'scoped memory for tpu_custom_call.1']
    #allocation11 [shape = 'u8[8192]{0}', space=vmem, size = 0x2000, scoped, tag = 'output window, operand 0, single buffered']
    %11 = vsyncpa [#allocation4], 0
    %12 = vsyncpa [#allocation7], 0
    %13 = vsyncpa [#allocation10], 0
    %14 = vsyncpa [#allocation5], 0
    // Predicated region
    $region2: #{tpu_custom_call.1} parent=1 // pred_check
      _
    $region3: #{tpu_custom_call.1} parent=1 // pred_check_branch
      %16 = sbr.rel (0) target = $region5
    $region4: #{tpu_custom_call.1} parent=1 // pred_region
      %s18 = ssub.s32 256, 256
      %19 = vsyncadd [#allocation4], %s18
      %s20 = sshll.u32 [#allocation3], 4
      %s21 = int_to_ptr.vmem [resolvable:$true] %s20
      %26 = dma.hbm_to_vmem [thread:$0]  %s0, 256, %s21, [#allocation4], 128, 128, 8
    $region5: #{tpu_custom_call.1} parent=1 // pred_fallthru
      _
    // Predicated region
    $region6: #{tpu_custom_call.1} parent=1 // pred_check
      _
    $region7: #{tpu_custom_call.1} parent=1 // pred_check_branch
      %28 = sbr.rel (0) target = $region9
    $region8: #{tpu_custom_call.1} parent=1 // pred_region
      %s30 = ssub.s32 256, 256
      %31 = vsyncadd [#allocation7], %s30
      %s32 = sshll.u32 [#allocation6], 4
      %s33 = int_to_ptr.vmem [resolvable:$true] %s32
      %38 = dma.hbm_to_vmem [thread:$0]  %s1, 256, %s33, [#allocation7], 128, 128, 8
    $region9: #{tpu_custom_call.1} parent=1 // pred_fallthru
      _
    // Predicated region
    $region10: #{tpu_custom_call.1} parent=1 // pred_check
      _
    $region11: #{tpu_custom_call.1} parent=1 // pred_check_branch
      %40 = sbr.rel (0) target = $region13
    $region12: #{tpu_custom_call.1} parent=1 // pred_region
      %s42 = ssub.s32 2048, 2048
      %43 = vsyncadd [#allocation7], %s42
      %s44 = sshll.u32 [#allocation8], 4
      %s45 = int_to_ptr.vmem [resolvable:$true] %s44
      %50 = dma.hbm_to_vmem [thread:$0]  %s2, 2048, %s45, [#allocation7], 128, 128, 8
    $region13: #{tpu_custom_call.1} parent=1 // pred_fallthru
      _
    // Predicated region
    $region14: #{tpu_custom_call.1} parent=1 // pred_check
      _
    $region15: #{tpu_custom_call.1} parent=1 // pred_check_branch
      %52 = sbr.rel (0) target = $region17
    $region16: #{tpu_custom_call.1} parent=1 // pred_region
      _
    $region17: #{tpu_custom_call.1} parent=1 // pred_fallthru
      _
    // Predicated region
    $region18: #{tpu_custom_call.1} parent=1 // pred_check
      _
    $region19: #{tpu_custom_call.1} parent=1 // pred_check_branch
      %54 = sbr.rel (0) target = $region21
    $region20: #{tpu_custom_call.1} parent=1 // pred_region
      %s56 = ssub.s32 2048, 2048
      %57 = vsyncadd [#allocation10], %s56
      %s58 = sshll.u32 [#allocation9], 4
      %s59 = int_to_ptr.vmem [resolvable:$true] %s58
      %64 = dma.hbm_to_vmem [thread:$0]  %s4, 2048, %s59, [#allocation10], 128, 128, 8
    $region21: #{tpu_custom_call.1} parent=1 // pred_fallthru
      _
    // Predicated region
    $region22: #{tpu_custom_call.1} parent=1 // pred_check
      _
    $region23: #{tpu_custom_call.1} parent=1 // pred_check_branch
      %66 = sbr.rel (0) target = $region25
    $region24: #{tpu_custom_call.1} parent=1 // pred_region
      _
    $region25: #{tpu_custom_call.1} parent=1 // pred_fallthru
      _
    // Predicated region
    $region26: #{tpu_custom_call.1} parent=1 // pred_check
      _
    $region27: #{tpu_custom_call.1} parent=1 // pred_check_branch
      %68 = sbr.rel (0) target = $region29
    $region28: #{tpu_custom_call.1} parent=1 // pred_region
      %69 = dma.done [#allocation4], 256
    $region29: #{tpu_custom_call.1} parent=1 // pred_fallthru
      _
    // Predicated region
    $region30: #{tpu_custom_call.1} parent=1 // pred_check
      _
    $region31: #{tpu_custom_call.1} parent=1 // pred_check_branch
      %71 = sbr.rel (0) target = $region33
    $region32: #{tpu_custom_call.1} parent=1 // pred_region
      %72 = dma.done [#allocation7], 256
    $region33: #{tpu_custom_call.1} parent=1 // pred_fallthru
      _
    // Predicated region
    $region34: #{tpu_custom_call.1} parent=1 // pred_check
      _
    $region35: #{tpu_custom_call.1} parent=1 // pred_check_branch
      %74 = sbr.rel (0) target = $region37
    $region36: #{tpu_custom_call.1} parent=1 // pred_region
      %75 = dma.done [#allocation7], 2048
    $region37: #{tpu_custom_call.1} parent=1 // pred_fallthru
      _
    // Predicated region
    $region38: #{tpu_custom_call.1} parent=1 // pred_check
      _
    $region39: #{tpu_custom_call.1} parent=1 // pred_check_branch
      %77 = sbr.rel (0) target = $region41
    $region40: #{tpu_custom_call.1} parent=1 // pred_region
      %78 = dma.done [#allocation10], 2048
    $region41: #{tpu_custom_call.1} parent=1 // pred_fallthru
      _
    %p79 = scmp.eq.s32.totalorder 0, 0
    // Predicated region
    $region42: #{tpu_custom_call.1} parent=1 // pred_check
      %p80 = pneg %p79
    $region43: #{tpu_custom_call.1} parent=1 // pred_check_branch
      %82 = sbr.rel (%p80) target = $region45
    $region44: #{tpu_custom_call.1} parent=1 // pred_region
      %v83 = vld [vmem:[#allocation3] sm:$0xff]
      %v84 = vld [vmem:[#allocation3 + $0x8] sm:$0xff]
      %v85 = vld [vmem:[#allocation8] sm:$0xff]
      %v86 = vld [vmem:[#allocation8 + $0x8] sm:$0xff]
      %v87 = vld [vmem:[#allocation8 + $0x10] sm:$0xff]
      %v88 = vld [vmem:[#allocation8 + $0x18] sm:$0xff]
      %v89 = vld [vmem:[#allocation8 + $0x20] sm:$0xff]
      %v90 = vld [vmem:[#allocation8 + $0x28] sm:$0xff]
      %v91 = vld [vmem:[#allocation8 + $0x30] sm:$0xff]
      %v92 = vld [vmem:[#allocation8 + $0x38] sm:$0xff]
      %v93 = vld [vmem:[#allocation8 + $0x40] sm:$0xff]
      %v94 = vld [vmem:[#allocation8 + $0x48] sm:$0xff]
      %v95 = vld [vmem:[#allocation8 + $0x50] sm:$0xff]
      %v96 = vld [vmem:[#allocation8 + $0x58] sm:$0xff]
      %v97 = vld [vmem:[#allocation8 + $0x60] sm:$0xff]
      %v98 = vld [vmem:[#allocation8 + $0x68] sm:$0xff]
      %v99 = vld [vmem:[#allocation8 + $0x70] sm:$0xff]
      %v100 = vld [vmem:[#allocation8 + $0x78] sm:$0xff]
      %101 = vmatprep.subr.mxu0 0.0
      %102 = vmatpush1.msra.mxu0 %v85
      %103 = vmatprep.subr.mxu0 0.0
      %104 = vmatpush1.msra.mxu0 %v86
      %105 = vmatprep.subr.mxu0 0.0
      %106 = vmatpush1.msra.mxu0 %v87
      %107 = vmatprep.subr.mxu0 0.0
      %108 = vmatpush1.msra.mxu0 %v88
      %109 = vmatprep.subr.mxu0 0.0
      %110 = vmatpush1.msra.mxu0 %v89
      %111 = vmatprep.subr.mxu0 0.0
      %112 = vmatpush1.msra.mxu0 %v90
      %113 = vmatprep.subr.mxu0 0.0
      %114 = vmatpush1.msra.mxu0 %v91
      %115 = vmatprep.subr.mxu0 0.0
      %116 = vmatpush1.msra.mxu0 %v92
      %117 = vmatprep.subr.mxu0 0.0
      %118 = vmatpush1.msra.mxu0 %v93
      %119 = vmatprep.subr.mxu0 0.0
      %120 = vmatpush1.msra.mxu0 %v94
      %121 = vmatprep.subr.mxu0 0.0
      %122 = vmatpush1.msra.mxu0 %v95
      %123 = vmatprep.subr.mxu0 0.0
      %124 = vmatpush1.msra.mxu0 %v96
      %125 = vmatprep.subr.mxu0 0.0
      %126 = vmatpush1.msra.mxu0 %v97
      %127 = vmatprep.subr.mxu0 0.0
      %128 = vmatpush1.msra.mxu0 %v98
      %129 = vmatprep.subr.mxu0 0.0
      %130 = vmatpush1.msra.mxu0 %v99
      %131 = vmatprep.subr.mxu0 0.0
      %132 = vmatpush1.msra.mxu0 %v100
      %133 = vmatprep.subr.mxu0 0.0
      %134 = vmatpush1.msra.mxu0 0.0
      %135 = vmatprep.subr.mxu0 0.0
      %136 = vmatpush1.msra.mxu0 0.0
      %137 = vmatprep.subr.mxu0 0.0
      %138 = vmatpush1.msra.mxu0 0.0
      %139 = vmatprep.subr.mxu0 0.0
      %140 = vmatpush1.msra.mxu0 0.0
      %141 = vmatprep.subr.mxu0 0.0
      %142 = vmatpush1.msra.mxu0 0.0
      %143 = vmatprep.subr.mxu0 0.0
      %144 = vmatpush1.msra.mxu0 0.0
      %145 = vmatprep.subr.mxu0 0.0
      %146 = vmatpush1.msra.mxu0 0.0
      %147 = vmatprep.subr.mxu0 0.0
      %148 = vmatpush1.msra.mxu0 0.0
      %149 = vmatprep.subr.mxu0 0.0
      %150 = vmatpush1.msra.mxu0 0.0
      %151 = vmatprep.subr.mxu0 0.0
      %152 = vmatpush1.msra.mxu0 0.0
      %153 = vmatprep.subr.mxu0 0.0
      %154 = vmatpush1.msra.mxu0 0.0
      %155 = vmatprep.subr.mxu0 0.0
      %156 = vmatpush1.msra.mxu0 0.0
      %157 = vmatprep.subr.mxu0 0.0
      %158 = vmatpush1.msra.mxu0 0.0
      %159 = vmatprep.subr.mxu0 0.0
      %160 = vmatpush1.msra.mxu0 0.0
      %161 = vmatprep.subr.mxu0 0.0
      %162 = vmatpush1.msra.mxu0 0.0
      %163 = vmatprep.subr.mxu0 0.0
      %164 = vmatpush1.msra.mxu0 0.0
      %165 = vmatprep.mubr.f32.mxu0 0.0
      %166 = vmatmul.mubr.f32.gmra.mrb[0].mxu0 %v83
      %v167 = vpop.f32.mrb[0].mxu0
      %v168 = vadd.f32 0.0, %v167
      %v169 = vpop.f32.mrb[0].mxu0
      %170 = vmatprep.mubr.f32.mxu0 0.0
      %171 = vmatmul.mubr.f32.gmra.mrb[0].mxu0 %v84
      %v172 = vpop.f32.mrb[0].mxu0
      %v173 = vadd.f32 0.0, %v172
      %v174 = vpop.f32.mrb[0].mxu0
      %175 = vdwg.mxu0
      %176 = vst [vmem:[#allocation2] sm:$0xff] %v168
      %177 = vst [vmem:[#allocation2 + $0x8] sm:$0xff] %v173
    $region45: #{tpu_custom_call.1} parent=1 // pred_fallthru
      _
    %v178 = vld [vmem:[#allocation6] sm:$0xff]
    %v179 = vld [vmem:[#allocation6 + $0x8] sm:$0xff]
    %v180 = vld [vmem:[#allocation2] sm:$0xff]
    %v181 = vld [vmem:[#allocation2 + $0x8] sm:$0xff]
    %v182 = vld [vmem:[%s3] sm:$0x1]
    %v184 = vlaneseq
    %v185 = vshrl.u32 %v184, 7
    %v186 = vsub.s32 0, %v185
    %v187 = vrot.slane %v182, %v186
    %vm189 = vcmask 130048
    %v191 = vsel %vm189, %v178, 0
    %v194 = vsel %vm189, %v179, 0
    %196 = vmatprep.subr.mxu0 0.0
    %197 = vmatpush1.msra.mxu0 %v180
    %198 = vmatprep.subr.mxu0 0.0
    %199 = vmatpush1.msra.mxu0 %v181
    %200 = vmatprep.subr.mxu0 0.0
    %201 = vmatpush1.msra.mxu0 0.0
    %202 = vmatprep.subr.mxu0 0.0
    %203 = vmatpush1.msra.mxu0 0.0
    %204 = vmatprep.subr.mxu0 0.0
    %205 = vmatpush1.msra.mxu0 0.0
    %206 = vmatprep.subr.mxu0 0.0
    %207 = vmatpush1.msra.mxu0 0.0
    %208 = vmatprep.subr.mxu0 0.0
    %209 = vmatpush1.msra.mxu0 0.0
    %210 = vmatprep.subr.mxu0 0.0
    %211 = vmatpush1.msra.mxu0 0.0
    %212 = vmatprep.subr.mxu0 0.0
    %213 = vmatpush1.msra.mxu0 0.0
    %214 = vmatprep.subr.mxu0 0.0
    %215 = vmatpush1.msra.mxu0 0.0
    %216 = vmatprep.subr.mxu0 0.0
    %217 = vmatpush1.msra.mxu0 0.0
    %218 = vmatprep.subr.mxu0 0.0
    %219 = vmatpush1.msra.mxu0 0.0
    %220 = vmatprep.subr.mxu0 0.0
    %221 = vmatpush1.msra.mxu0 0.0
    %222 = vmatprep.subr.mxu0 0.0
    %223 = vmatpush1.msra.mxu0 0.0
    %224 = vmatprep.subr.mxu0 0.0
    %225 = vmatpush1.msra.mxu0 0.0
    %226 = vmatprep.subr.mxu0 0.0
    %227 = vmatpush1.msra.mxu0 0.0
    %228 = vmatprep.subr.mxu0 0.0
    %229 = vmatpush1.msra.mxu0 0.0
    %230 = vmatprep.subr.mxu0 0.0
    %231 = vmatpush1.msra.mxu0 0.0
    %232 = vmatprep.subr.mxu0 0.0
    %233 = vmatpush1.msra.mxu0 0.0
    %234 = vmatprep.subr.mxu0 0.0
    %235 = vmatpush1.msra.mxu0 0.0
    %236 = vmatprep.subr.mxu0 0.0
    %237 = vmatpush1.msra.mxu0 0.0
    %238 = vmatprep.subr.mxu0 0.0
    %239 = vmatpush1.msra.mxu0 0.0
    %240 = vmatprep.subr.mxu0 0.0
    %241 = vmatpush1.msra.mxu0 0.0
    %242 = vmatprep.subr.mxu0 0.0
    %243 = vmatpush1.msra.mxu0 0.0
    %244 = vmatprep.subr.mxu0 0.0
    %245 = vmatpush1.msra.mxu0 0.0
    %246 = vmatprep.subr.mxu0 0.0
    %247 = vmatpush1.msra.mxu0 0.0
    %248 = vmatprep.subr.mxu0 0.0
    %249 = vmatpush1.msra.mxu0 0.0
    %250 = vmatprep.subr.mxu0 0.0
    %251 = vmatpush1.msra.mxu0 0.0
    %252 = vmatprep.subr.mxu0 0.0
    %253 = vmatpush1.msra.mxu0 0.0
    %254 = vmatprep.subr.mxu0 0.0
    %255 = vmatpush1.msra.mxu0 0.0
    %256 = vmatprep.subr.mxu0 0.0
    %257 = vmatpush1.msra.mxu0 0.0
    %258 = vmatprep.subr.mxu0 0.0
    %259 = vmatpush1.msra.mxu0 0.0
    %260 = vmatprep.mubr.f32.mxu0 0.0
    %261 = vmatmul.mubr.f32.gmra.mrb[0].mxu0 %v191
    %v262 = vpop.f32.mrb[0].mxu0
    %v263 = vadd.f32 %v187, %v262
    %v264 = vpop.f32.mrb[0].mxu0
    %265 = vmatprep.mubr.f32.mxu0 0.0
    %266 = vmatmul.mubr.f32.gmra.mrb[0].mxu0 %v194
    %v267 = vpop.f32.mrb[0].mxu0
    %v268 = vadd.f32 %v187, %v267
    %v269 = vpop.f32.mrb[0].mxu0
    %270 = vdwg.mxu0
    %v271 = vmax.f32 %v263, 0.0
    %v272 = vmax.f32 %v268, 0.0
    %v273 = vld [vmem:[#allocation9] sm:$0xff]
    %v274 = vld [vmem:[#allocation9 + $0x8] sm:$0xff]
    %v275 = vld [vmem:[#allocation9 + $0x10] sm:$0xff]
    %v276 = vld [vmem:[#allocation9 + $0x18] sm:$0xff]
    %v277 = vld [vmem:[#allocation9 + $0x20] sm:$0xff]
    %v278 = vld [vmem:[#allocation9 + $0x28] sm:$0xff]
    %v279 = vld [vmem:[#allocation9 + $0x30] sm:$0xff]
    %v280 = vld [vmem:[#allocation9 + $0x38] sm:$0xff]
    %v281 = vld [vmem:[#allocation9 + $0x40] sm:$0xff]
    %v282 = vld [vmem:[#allocation9 + $0x48] sm:$0xff]
    %v283 = vld [vmem:[#allocation9 + $0x50] sm:$0xff]
    %v284 = vld [vmem:[#allocation9 + $0x58] sm:$0xff]
    %v285 = vld [vmem:[#allocation9 + $0x60] sm:$0xff]
    %v286 = vld [vmem:[#allocation9 + $0x68] sm:$0xff]
    %v287 = vld [vmem:[#allocation9 + $0x70] sm:$0xff]
    %v288 = vld [vmem:[#allocation9 + $0x78] sm:$0xff]
    %v289 = vld [vmem:[%s5] sm:$0x1]
    %v291 = vlaneseq
    %v292 = vshrl.u32 %v291, 7
    %v293 = vsub.s32 0, %v292
    %v294 = vrot.slane %v289, %v293
    %296 = vmatprep.subr.mxu0 0.0
    %297 = vmatpush1.msra.mxu0 %v273
    %298 = vmatprep.subr.mxu0 0.0
    %299 = vmatpush1.msra.mxu0 %v274
    %300 = vmatprep.subr.mxu0 0.0
    %301 = vmatpush1.msra.mxu0 %v275
    %302 = vmatprep.subr.mxu0 0.0
    %303 = vmatpush1.msra.mxu0 %v276
    %304 = vmatprep.subr.mxu0 0.0
    %305 = vmatpush1.msra.mxu0 %v277
    %306 = vmatprep.subr.mxu0 0.0
    %307 = vmatpush1.msra.mxu0 %v278
    %308 = vmatprep.subr.mxu0 0.0
    %309 = vmatpush1.msra.mxu0 %v279
    %310 = vmatprep.subr.mxu0 0.0
    %311 = vmatpush1.msra.mxu0 %v280
    %312 = vmatprep.subr.mxu0 0.0
    %313 = vmatpush1.msra.mxu0 %v281
    %314 = vmatprep.subr.mxu0 0.0
    %315 = vmatpush1.msra.mxu0 %v282
    %316 = vmatprep.subr.mxu0 0.0
    %317 = vmatpush1.msra.mxu0 %v283
    %318 = vmatprep.subr.mxu0 0.0
    %319 = vmatpush1.msra.mxu0 %v284
    %320 = vmatprep.subr.mxu0 0.0
    %321 = vmatpush1.msra.mxu0 %v285
    %322 = vmatprep.subr.mxu0 0.0
    %323 = vmatpush1.msra.mxu0 %v286
    %324 = vmatprep.subr.mxu0 0.0
    %325 = vmatpush1.msra.mxu0 %v287
    %326 = vmatprep.subr.mxu0 0.0
    %327 = vmatpush1.msra.mxu0 %v288
    %328 = vmatprep.subr.mxu0 0.0
    %329 = vmatpush1.msra.mxu0 0.0
    %330 = vmatprep.subr.mxu0 0.0
    %331 = vmatpush1.msra.mxu0 0.0
    %332 = vmatprep.subr.mxu0 0.0
    %333 = vmatpush1.msra.mxu0 0.0
    %334 = vmatprep.subr.mxu0 0.0
    %335 = vmatpush1.msra.mxu0 0.0
    %336 = vmatprep.subr.mxu0 0.0
    %337 = vmatpush1.msra.mxu0 0.0
    %338 = vmatprep.subr.mxu0 0.0
    %339 = vmatpush1.msra.mxu0 0.0
    %340 = vmatprep.subr.mxu0 0.0
    %341 = vmatpush1.msra.mxu0 0.0
    %342 = vmatprep.subr.mxu0 0.0
    %343 = vmatpush1.msra.mxu0 0.0
    %344 = vmatprep.subr.mxu0 0.0
    %345 = vmatpush1.msra.mxu0 0.0
    %346 = vmatprep.subr.mxu0 0.0
    %347 = vmatpush1.msra.mxu0 0.0
    %348 = vmatprep.subr.mxu0 0.0
    %349 = vmatpush1.msra.mxu0 0.0
    %350 = vmatprep.subr.mxu0 0.0
    %351 = vmatpush1.msra.mxu0 0.0
    %352 = vmatprep.subr.mxu0 0.0
    %353 = vmatpush1.msra.mxu0 0.0
    %354 = vmatprep.subr.mxu0 0.0
    %355 = vmatpush1.msra.mxu0 0.0
    %356 = vmatprep.subr.mxu0 0.0
    %357 = vmatpush1.msra.mxu0 0.0
    %358 = vmatprep.subr.mxu0 0.0
    %359 = vmatpush1.msra.mxu0 0.0
    %360 = vmatprep.mubr.f32.mxu0 0.0
    %361 = vmatmul.mubr.f32.gmra.mrb[0].mxu0 %v271
    %v362 = vpop.f32.mrb[0].mxu0
    %v363 = vadd.f32 %v294, %v362
    %v364 = vpop.f32.mrb[0].mxu0
    %365 = vmatprep.mubr.f32.mxu0 0.0
    %366 = vmatmul.mubr.f32.gmra.mrb[0].mxu0 %v272
    %v367 = vpop.f32.mrb[0].mxu0
    %v368 = vadd.f32 %v294, %v367
    %v369 = vpop.f32.mrb[0].mxu0
    %370 = vdwg.mxu0
    %371 = vst [vmem:[#allocation11] sm:$0xff] %v363
    %372 = vst [vmem:[#allocation11 + $0x8] sm:$0xff] %v368
    // Predicated region
    $region46: #{tpu_custom_call.1} parent=1 // pred_check
      _
    $region47: #{tpu_custom_call.1} parent=1 // pred_check_branch
      %374 = sbr.rel (0) target = $region49
    $region48: #{tpu_custom_call.1} parent=1 // pred_region
      %s376 = ssub.s32 256, 256
      %377 = vsyncadd [#allocation5], %s376
      %s378 = sshll.u32 [#allocation11], 4
      %s379 = int_to_ptr.vmem [resolvable:$true] %s378
      %384 = dma.vmem_to_hbm [thread:$0]  %s379, 256, %s6, [#allocation5], 128, 128, 8
    $region49: #{tpu_custom_call.1} parent=1 // pred_fallthru
      _
    // Predicated region
    $region50: #{tpu_custom_call.1} parent=1 // pred_check
      _
    $region51: #{tpu_custom_call.1} parent=1 // pred_check_branch
      %386 = sbr.rel (0) target = $region53
    $region52: #{tpu_custom_call.1} parent=1 // pred_region
      %387 = dma.done [#allocation5], 256
    $region53: #{tpu_custom_call.1} parent=1 // pred_fallthru
      _
    %388 = vsyncpa [#allocation4], 1
    %389 = vsyncpa [#allocation7], 1
    %390 = vsyncpa [#allocation10], 1
    %391 = vsyncpa [#allocation5], 1

</llo_original>
